<compile_context>
chip_gen: v7x
topology: tpu7x:2x2x1
jax: 0.10.0
libtpu: 0.0.40
codegen_flags: <defaults>
</compile_context>

<pallas_src>
import jax
import jax.numpy as jnp
from jax.experimental import pallas as pl
from jax.experimental.pallas import tpu as pltpu


def chain_mm_cat_kernel(xs_ref, out_ref):
    # xs_ref: 1-D f32 SMEM ref of shape (2K,) holding [x1 (K,), x2 (K,)].
    # out_ref: 1-D f32 SMEM ref of shape (6,).
    # Everything stays on the scalar path: K muls + (K-1) adds + 2 muls + 6 stores.
    K = xs_ref.shape[0] // 2
    s = xs_ref[0] * xs_ref[K]
    for i in range(1, K):  # statically unrolled, K == 4
        s = s + xs_ref[i] * xs_ref[K + i]

    s2 = s * s        # == torch.mm(v1, v2) == torch.mm(v2, v3) == v4   (all (1,1))
    s3 = s2 * s       # == torch.mm(v3, v4)

    # Output pattern along the concat axis is [s2, s2, s3, s2, s2, s3].
    out_ref[0] = s2
    out_ref[1] = s2
    out_ref[2] = s3
    out_ref[3] = s2
    out_ref[4] = s2
    out_ref[5] = s3


def chain_mm_cat(x1, x2):
    M, K = x1.shape
    K2, M2 = x2.shape
    assert K == K2 and M == M2, "shapes must allow the mm chain (x1:(M,K), x2:(K,M))"
    # The algebraic dedup (v1 == v2 == v3 == scalar s) relies on M == 1, which is
    # exactly what the original module uses (x1: (1,4), x2: (4,1)).
    assert M == 1, "this kernel specializes the module's fixed M == 1 case"

    # Wrapper-side layout plumbing (plain XLA, trivially cheap): pack both operands
    # into a single flat (2K,) f32 vector so the kernel gets ONE SMEM input DMA.
    packed = jnp.concatenate([x1.reshape(K), x2.reshape(K)], axis=0)

    flops = 2 * K + 2                       # K mul + (K-1) add + 2 scalar muls (~10)
    bytes_accessed = 4 * (2 * K + 6)        # 2K f32 in + 6 f32 out (~56 B)

    out_flat = pl.pallas_call(
        chain_mm_cat_kernel,
        out_shape=jax.ShapeDtypeStruct((6,), jnp.float32),
        in_specs=[pl.BlockSpec(memory_space=pltpu.MemorySpace.SMEM)],
        out_specs=pl.BlockSpec(memory_space=pltpu.MemorySpace.SMEM),
        # Advisory: keep XLA from over-scheduling around a ~10-flop custom call.
        cost_estimate=pl.CostEstimate(
            flops=flops, transcendentals=0, bytes_accessed=bytes_accessed),
    )(packed)

    # (6,) -> (1, 6): layout plumbing outside the kernel.
    return out_flat.reshape(M, 6 * M)


def reference(x1, x2):
    # Pure-JAX mirror of the PyTorch forward (including redundant recomputation).
    v1 = x1 @ x2
    v2 = x1 @ x2
    v3 = x1 @ x2
    v4 = v1 @ v2
    a = v1 @ v2
    b = v2 @ v3
    c = v3 @ v4
    return jnp.concatenate([a, b, c, a, b, c], axis=1)


if __name__ == "__main__":
    key = jax.random.PRNGKey(0)
    k1, k2 = jax.random.split(key)
    # Shapes implied by the module: x1 = randn(1, 4), x2 = randn(4, 1)
    x1 = jax.random.normal(k1, (1, 4), dtype=jnp.float32)
    x2 = jax.random.normal(k2, (4, 1), dtype=jnp.float32)

    out = chain_mm_cat(x1, x2)
    out = jax.block_until_ready(out)

    ref = reference(x1, x2)
    assert out.shape == (1, 6), out.shape
    assert jnp.allclose(out, ref, rtol=1e-5, atol=1e-5), (out, ref)

    print("KERNEL_OK")
</pallas_src>

<mosaic_0001>
module attributes {stable_mosaic.version = 11 : i64} {
  func.func @chain_mm_cat_kernel(%arg0: memref<8xf32, #tpu.memory_space<smem>>, %arg1: memref<6xf32, #tpu.memory_space<smem>>) attributes {dimension_semantics = [], scalar_prefetch = 0 : i64, scratch_operands = 0 : i64, tpu.core_type = #tpu.core_type<tc>} {
    %c0 = arith.constant 0 : index
    %0 = memref.load %arg0[%c0] : memref<8xf32, #tpu.memory_space<smem>>
    %c4 = arith.constant 4 : index
    %1 = memref.load %arg0[%c4] : memref<8xf32, #tpu.memory_space<smem>>
    %2 = arith.mulf %0, %1 : f32
    %c1 = arith.constant 1 : index
    %3 = memref.load %arg0[%c1] : memref<8xf32, #tpu.memory_space<smem>>
    %c5 = arith.constant 5 : index
    %4 = memref.load %arg0[%c5] : memref<8xf32, #tpu.memory_space<smem>>
    %5 = arith.mulf %3, %4 : f32
    %6 = arith.addf %2, %5 : f32
    %c2 = arith.constant 2 : index
    %7 = memref.load %arg0[%c2] : memref<8xf32, #tpu.memory_space<smem>>
    %c6 = arith.constant 6 : index
    %8 = memref.load %arg0[%c6] : memref<8xf32, #tpu.memory_space<smem>>
    %9 = arith.mulf %7, %8 : f32
    %10 = arith.addf %6, %9 : f32
    %c3 = arith.constant 3 : index
    %11 = memref.load %arg0[%c3] : memref<8xf32, #tpu.memory_space<smem>>
    %c7 = arith.constant 7 : index
    %12 = memref.load %arg0[%c7] : memref<8xf32, #tpu.memory_space<smem>>
    %13 = arith.mulf %11, %12 : f32
    %14 = arith.addf %10, %13 : f32
    %15 = arith.mulf %14, %14 : f32
    %16 = arith.mulf %15, %14 : f32
    %c0_0 = arith.constant 0 : index
    %17 = memref.load %arg1[%c0_0] : memref<6xf32, #tpu.memory_space<smem>>
    memref.store %15, %arg1[%c0_0] : memref<6xf32, #tpu.memory_space<smem>>
    %c1_1 = arith.constant 1 : index
    %18 = memref.load %arg1[%c1_1] : memref<6xf32, #tpu.memory_space<smem>>
    memref.store %15, %arg1[%c1_1] : memref<6xf32, #tpu.memory_space<smem>>
    %c2_2 = arith.constant 2 : index
    %19 = memref.load %arg1[%c2_2] : memref<6xf32, #tpu.memory_space<smem>>
    memref.store %16, %arg1[%c2_2] : memref<6xf32, #tpu.memory_space<smem>>
    %c3_3 = arith.constant 3 : index
    %20 = memref.load %arg1[%c3_3] : memref<6xf32, #tpu.memory_space<smem>>
    memref.store %15, %arg1[%c3_3] : memref<6xf32, #tpu.memory_space<smem>>
    %c4_4 = arith.constant 4 : index
    %21 = memref.load %arg1[%c4_4] : memref<6xf32, #tpu.memory_space<smem>>
    memref.store %15, %arg1[%c4_4] : memref<6xf32, #tpu.memory_space<smem>>
    %c5_5 = arith.constant 5 : index
    %22 = memref.load %arg1[%c5_5] : memref<6xf32, #tpu.memory_space<smem>>
    memref.store %16, %arg1[%c5_5] : memref<6xf32, #tpu.memory_space<smem>>
    return
  }
}

</mosaic_0001>

<llo_original>
// kernel: tpu_custom_call.1
$region0: #{tpu_custom_call.1}
  #allocation0 [shape = 'u32[]', space=smem, size = 0x4, offset = 0x4, fixed_abs, tag = 'smem constant byte address 0x4 - core index']
  #allocation1 [shape = 'u32[144,128]{1,0:T(1,128)}', space=vmem, size = 0x12000, scoped, tag = 'internal scratch']
  %s0 = inlined_call_operand.hbm [shape: f32[8], index: 0, kind: input, shape index: {}]
  %s1 = inlined_call_operand.hbm [shape: f32[6], index: 1, kind: output, shape index: {}]
  %s2 = sld [smem:[#allocation0]]
  $region18: #{tpu_custom_call.1} parent=0
    _
  %s4 = ssub.s32 1, %s2
  %s5 = scalar_select 0, %s4, %s2
  $region1: #{tpu_custom_call.1} parent=0
    #allocation2 [shape = 'u8[512]{0}', space=smem, size = 0x200, scoped, tag = 'input window, operand 0, single buffered']
    #allocation3 [shape = 's32[1]{0}', space=sflag, size = 0x4, scoped, tag = 'scoped memory for tpu_custom_call.1']
    #allocation4 [shape = 's32[1]{0}', space=sflag, size = 0x4, scoped, tag = 'scoped memory for tpu_custom_call.1']
    #allocation5 [shape = 'u8[512]{0}', space=smem, size = 0x200, scoped, tag = 'output window, operand 0, single buffered']
    %6 = vsyncpa [#allocation3], 0
    %7 = vsyncpa [#allocation4], 0
    // Predicated region
    $region2: #{tpu_custom_call.1} parent=1 // pred_check
      _
    $region3: #{tpu_custom_call.1} parent=1 // pred_check_branch
      %9 = sbr.rel (0) target = $region5
    $region4: #{tpu_custom_call.1} parent=1 // pred_region
      %s11 = ssub.s32 16, 16
      %12 = vsyncadd [#allocation3], %s11
      %15 = dma.hbm_to_smem %s0, 16, [#allocation2], [#allocation3]
    $region5: #{tpu_custom_call.1} parent=1 // pred_fallthru
      _
    // Predicated region
    $region6: #{tpu_custom_call.1} parent=1 // pred_check
      _
    $region7: #{tpu_custom_call.1} parent=1 // pred_check_branch
      %17 = sbr.rel (0) target = $region9
    $region8: #{tpu_custom_call.1} parent=1 // pred_region
      %18 = dma.done [#allocation3], 16
    $region9: #{tpu_custom_call.1} parent=1 // pred_fallthru
      _
    %19 = sfence
    %s20 = sld [smem:[#allocation2]]
    %s21 = sld [smem:[#allocation2 + $0x4]]
    %s22 = smul.f32 %s20, %s21
    %s23 = sld [smem:[#allocation2 + $0x1]]
    %s24 = sld [smem:[#allocation2 + $0x5]]
    %s25 = smul.f32 %s23, %s24
    %s26 = sadd.f32 %s22, %s25
    %s27 = sld [smem:[#allocation2 + $0x2]]
    %s28 = sld [smem:[#allocation2 + $0x6]]
    %s29 = smul.f32 %s27, %s28
    %s30 = sadd.f32 %s26, %s29
    %s31 = sld [smem:[#allocation2 + $0x3]]
    %s32 = sld [smem:[#allocation2 + $0x7]]
    %s33 = smul.f32 %s31, %s32
    %s34 = sadd.f32 %s30, %s33
    %s35 = smul.f32 %s34, %s34
    %s36 = smul.f32 %s35, %s34
    %s37 = scalar_lea.smem [#allocation5], 0
    %38 = sst [smem:[%s37]] %s35
    %s39 = scalar_lea.smem [#allocation5], 1
    %40 = sst [smem:[%s39]] %s35
    %s41 = scalar_lea.smem [#allocation5], 2
    %42 = sst [smem:[%s41]] %s36
    %s43 = scalar_lea.smem [#allocation5], 3
    %44 = sst [smem:[%s43]] %s35
    %s45 = scalar_lea.smem [#allocation5], 4
    %46 = sst [smem:[%s45]] %s35
    %s47 = scalar_lea.smem [#allocation5], 5
    %48 = sst [smem:[%s47]] %s36
    // Predicated region
    $region10: #{tpu_custom_call.1} parent=1 // pred_check
      _
    $region11: #{tpu_custom_call.1} parent=1 // pred_check_branch
      %50 = sbr.rel (0) target = $region13
    $region12: #{tpu_custom_call.1} parent=1 // pred_region
      %s52 = ssub.s32 16, 16
      %53 = vsyncadd [#allocation4], %s52
      %56 = dma.smem_to_hbm [#allocation5], 16, %s1, [#allocation4]
    $region13: #{tpu_custom_call.1} parent=1 // pred_fallthru
      _
    // Predicated region
    $region14: #{tpu_custom_call.1} parent=1 // pred_check
      _
    $region15: #{tpu_custom_call.1} parent=1 // pred_check_branch
      %58 = sbr.rel (0) target = $region17
    $region16: #{tpu_custom_call.1} parent=1 // pred_region
      %59 = dma.done [#allocation4], 16
    $region17: #{tpu_custom_call.1} parent=1 // pred_fallthru
      _
    %60 = sfence
    %61 = vsyncpa [#allocation3], 1
    %62 = vsyncpa [#allocation4], 1

</llo_original>
